<compile_context>
chip_gen: v5e
topology: v5e:2x2
jax: 0.10.0
libtpu: 0.0.40
codegen_flags: <defaults>
</compile_context>

<pallas_src>
import functools

import jax
import jax.numpy as jnp
from jax import lax
from jax.experimental import pallas as pl
from jax.experimental.pallas import tpu as pltpu

LOG_SIG_MAX = 2.0
LOG_SIG_MIN = -20.0

LANE = 128
DEFAULT_TILE_B = 4096


def _round_up(x, m):
    return ((x + m - 1) // m) * m


def _gaussian_policy_kernel(state_ref, w1_ref, b1_ref, w2_ref, b2_ref,
                            wh_ref, bh_ref, out_ref, *, half):
    # state tile: (TILE_B, num_inputs) f32; weights bf16; biases f32.
    x = state_ref[...].astype(jnp.bfloat16)

    # linear1 + relu (bf16 MXU, f32 accumulate; cast fused into relu)
    h1 = jnp.maximum(
        jnp.dot(x, w1_ref[...], preferred_element_type=jnp.float32)
        + b1_ref[...], 0.0).astype(jnp.bfloat16)

    # linear2 + relu
    h2 = jnp.maximum(
        jnp.dot(h1, w2_ref[...], preferred_element_type=jnp.float32)
        + b2_ref[...], 0.0).astype(jnp.bfloat16)

    # fused heads: one matmul produces [mean | log_std] in a single lane-dense
    # slab.  Clamp only the log_std lanes (col >= half) with a VPU select.
    heads = jnp.dot(h2, wh_ref[...], preferred_element_type=jnp.float32)
    heads = heads + bh_ref[...]
    col = lax.broadcasted_iota(jnp.int32, heads.shape, dimension=1)
    clamped = jnp.clip(heads, LOG_SIG_MIN, LOG_SIG_MAX)
    out_ref[...] = jnp.where(col >= half, clamped, heads).astype(out_ref.dtype)


@functools.partial(jax.jit,
                   static_argnames=("num_actions", "tile_b", "out_dtype"))
def gaussian_policy_forward(state, params, *, num_actions,
                            tile_b=DEFAULT_TILE_B, out_dtype=jnp.float32):
    """state: (B, num_inputs) f32. Returns (mean, log_std), each (B, num_actions)."""
    B, num_inputs = state.shape
    hidden_pad = params["w1"].shape[1]
    slab = params["w_heads"].shape[1]
    half = slab // 2

    # Lane-dense layout invariants (otherwise stores degrade to masked vst).
    assert slab % LANE == 0, "head slab width must be a multiple of 128"
    assert hidden_pad % LANE == 0, "hidden width must be a multiple of 128"
    assert half >= num_actions
    assert params["w1"].shape[0] == num_inputs

    # Always >= 2 (even) grid steps so ("parallel",) shards across both
    # TensorCores on v7x; tile sized so batch padding stays small.
    n_steps = max(2, pl.cdiv(B, tile_b))
    if n_steps % 2:
        n_steps += 1
    tb = _round_up(pl.cdiv(B, n_steps), 8)
    b_pad = tb * n_steps
    if b_pad != B:
        state = jnp.pad(state, ((0, b_pad - B), (0, 0)))

    def batch_spec(feat):
        return pl.BlockSpec((tb, feat), lambda i: (i, 0))

    def resident_spec(arr):
        return pl.BlockSpec(arr.shape, lambda i: (0, 0))

    flops = 2 * b_pad * (num_inputs * hidden_pad + hidden_pad * hidden_pad
                         + hidden_pad * slab)
    bytes_accessed = (
        b_pad * num_inputs * 4
        + b_pad * slab * jnp.dtype(out_dtype).itemsize
        + sum(int(p.size) * p.dtype.itemsize for p in params.values()))

    kernel = functools.partial(_gaussian_policy_kernel, half=half)

    out = pl.pallas_call(
        kernel,
        out_shape=jax.ShapeDtypeStruct((b_pad, slab), out_dtype),
        grid=(n_steps,),
        in_specs=[
            batch_spec(num_inputs),
            resident_spec(params["w1"]), resident_spec(params["b1"]),
            resident_spec(params["w2"]), resident_spec(params["b2"]),
            resident_spec(params["w_heads"]), resident_spec(params["b_heads"]),
        ],
        out_specs=batch_spec(slab),
        compiler_params=pltpu.CompilerParams(
            dimension_semantics=("parallel",),
            vmem_limit_bytes=48 * 1024 * 1024),
        cost_estimate=pl.CostEstimate(flops=flops, transcendentals=0,
                                      bytes_accessed=bytes_accessed),
    )(state, params["w1"], params["b1"], params["w2"], params["b2"],
      params["w_heads"], params["b_heads"])

    mean = out[:B, :num_actions]
    log_std = out[:B, half:half + num_actions]
    return mean, log_std


def _xavier_uniform(key, fan_in, fan_out):
    # Matches torch.nn.init.xavier_uniform_(gain=1); the bound is symmetric in
    # (fan_in, fan_out), so the transposed (in, out) storage layout is fine.
    bound = (6.0 / (fan_in + fan_out)) ** 0.5
    return jax.random.uniform(key, (fan_in, fan_out), jnp.float32,
                              minval=-bound, maxval=bound)


def init_params(key, num_inputs, num_actions, hidden_dim):
    """Weights pre-transposed to (in, out), zero-padded to lane-dense widths,
    cast to bf16 for the MXU.  Both heads are packed into one weight slab
    [Wm | Ws] of width 2*half (half = num_actions rounded up to 64)."""
    k1, k2, k3, k4 = jax.random.split(key, 4)
    hidden_pad = _round_up(hidden_dim, LANE)
    half = _round_up(num_actions, 64)          # slab = 2*half, multiple of 128

    w1 = _xavier_uniform(k1, num_inputs, hidden_dim)
    w1 = jnp.pad(w1, ((0, 0), (0, hidden_pad - hidden_dim)))

    w2 = _xavier_uniform(k2, hidden_dim, hidden_dim)
    w2 = jnp.pad(w2, ((0, hidden_pad - hidden_dim),
                      (0, hidden_pad - hidden_dim)))

    def head(k):
        w = _xavier_uniform(k, hidden_dim, num_actions)
        return jnp.pad(w, ((0, hidden_pad - hidden_dim),
                           (0, half - num_actions)))

    w_heads = jnp.concatenate([head(k3), head(k4)], axis=1)   # (hidden_pad, 2*half)

    return {
        "w1": w1.astype(jnp.bfloat16),
        "b1": jnp.zeros((1, hidden_pad), jnp.float32),
        "w2": w2.astype(jnp.bfloat16),
        "b2": jnp.zeros((1, hidden_pad), jnp.float32),
        "w_heads": w_heads.astype(jnp.bfloat16),
        "b_heads": jnp.zeros((1, 2 * half), jnp.float32),
    }


def _reference_forward(state, params, num_actions):
    # Pure-JAX reference mirroring the kernel math (bf16 matmuls, f32 accum).
    def mm(x, w):
        return jnp.dot(x.astype(jnp.bfloat16), w.astype(jnp.bfloat16),
                       preferred_element_type=jnp.float32)

    half = params["w_heads"].shape[1] // 2
    h1 = jnp.maximum(mm(state, params["w1"]) + params["b1"], 0.0)
    h2 = jnp.maximum(mm(h1, params["w2"]) + params["b2"], 0.0)
    heads = mm(h2, params["w_heads"]) + params["b_heads"]
    mean = heads[:, :num_actions]
    log_std = jnp.clip(heads[:, half:half + num_actions],
                       LOG_SIG_MIN, LOG_SIG_MAX)
    return mean, log_std


if __name__ == "__main__":
    # Small shapes consistent with the module: batch=4, num_inputs=16,
    # hidden_dim=32, num_actions=8.
    B, num_inputs, hidden_dim, num_actions = 4, 16, 32, 8

    key = jax.random.PRNGKey(0)
    k_state, k_params = jax.random.split(key)

    state = jax.random.normal(k_state, (B, num_inputs), jnp.float32)
    params = init_params(k_params, num_inputs, num_actions, hidden_dim)

    mean, log_std = gaussian_policy_forward(state, params,
                                            num_actions=num_actions)
    mean, log_std = jax.block_until_ready((mean, log_std))

    ref_mean, ref_log_std = _reference_forward(state, params, num_actions)

    assert mean.shape == (B, num_actions)
    assert log_std.shape == (B, num_actions)
    assert jnp.allclose(mean, ref_mean, atol=1e-4, rtol=1e-4)
    assert jnp.allclose(log_std, ref_log_std, atol=1e-4, rtol=1e-4)
    assert bool(jnp.all(log_std <= LOG_SIG_MAX)) and bool(
        jnp.all(log_std >= LOG_SIG_MIN))

    print("KERNEL_OK")
</pallas_src>

<mosaic_0001>
module attributes {stable_mosaic.version = 11 : i64} {
  func.func @_gaussian_policy_kernel(%arg0: i32, %arg1: memref<8x16xf32, #tpu.memory_space<vmem>>, %arg2: memref<16x128xbf16, #tpu.memory_space<vmem>>, %arg3: memref<1x128xf32, #tpu.memory_space<vmem>>, %arg4: memref<128x128xbf16, #tpu.memory_space<vmem>>, %arg5: memref<1x128xf32, #tpu.memory_space<vmem>>, %arg6: memref<128x128xbf16, #tpu.memory_space<vmem>>, %arg7: memref<1x128xf32, #tpu.memory_space<vmem>>, %arg8: memref<8x128xf32, #tpu.memory_space<vmem>>) attributes {dimension_semantics = [#tpu.dimension_semantics<parallel>], iteration_bounds = array<i64: 2>, scalar_prefetch = 0 : i64, scratch_operands = 0 : i64, tpu.core_type = #tpu.core_type<tc>, window_params = [{transform_indices = @transform_0, window_bounds = array<i64: 8, 16>}, {pipeline_mode = #tpu.pipeline_mode<synchronous>, transform_indices = @transform_1, window_bounds = array<i64: 16, 128>}, {pipeline_mode = #tpu.pipeline_mode<synchronous>, transform_indices = @transform_2, window_bounds = array<i64: 1, 128>}, {pipeline_mode = #tpu.pipeline_mode<synchronous>, transform_indices = @transform_3, window_bounds = array<i64: 128, 128>}, {pipeline_mode = #tpu.pipeline_mode<synchronous>, transform_indices = @transform_4, window_bounds = array<i64: 1, 128>}, {pipeline_mode = #tpu.pipeline_mode<synchronous>, transform_indices = @transform_5, window_bounds = array<i64: 128, 128>}, {pipeline_mode = #tpu.pipeline_mode<synchronous>, transform_indices = @transform_6, window_bounds = array<i64: 1, 128>}, {transform_indices = @transform_7, window_bounds = array<i64: 8, 128>}]} {
    %c0 = arith.constant 0 : index
    %c0_0 = arith.constant 0 : index
    %0 = vector.load %arg1[%c0, %c0_0] : memref<8x16xf32, #tpu.memory_space<vmem>>, vector<8x16xf32>
    %1 = arith.truncf %0 : vector<8x16xf32> to vector<8x16xbf16>
    %c0_1 = arith.constant 0 : index
    %c0_2 = arith.constant 0 : index
    %2 = vector.load %arg2[%c0_1, %c0_2] : memref<16x128xbf16, #tpu.memory_space<vmem>>, vector<16x128xbf16>
    %cst = arith.constant dense<0.000000e+00> : vector<8x128xf32>
    %3 = tpu.matmul %1, %2, %cst {dimension_numbers = #tpu.dot_dimension_numbers<[1], [0], [0], [1], [0, 0, 1, 1], [], []>} : vector<8x16xbf16>, vector<16x128xbf16>, vector<8x128xf32> -> vector<8x128xf32>
    %c0_3 = arith.constant 0 : index
    %c0_4 = arith.constant 0 : index
    %4 = vector.load %arg3[%c0_3, %c0_4] : memref<1x128xf32, #tpu.memory_space<vmem>>, vector<1x128xf32>
    %5 = vector.broadcast %4 : vector<1x128xf32> to vector<8x128xf32>
    %6 = arith.addf %3, %5 : vector<8x128xf32>
    %cst_5 = arith.constant 0.000000e+00 : f32
    %7 = vector.broadcast %cst_5 : f32 to vector<8x128xf32>
    %8 = arith.maximumf %6, %7 : vector<8x128xf32>
    %9 = arith.truncf %8 : vector<8x128xf32> to vector<8x128xbf16>
    %c0_6 = arith.constant 0 : index
    %c0_7 = arith.constant 0 : index
    %10 = vector.load %arg4[%c0_6, %c0_7] : memref<128x128xbf16, #tpu.memory_space<vmem>>, vector<128x128xbf16>
    %cst_8 = arith.constant dense<0.000000e+00> : vector<8x128xf32>
    %11 = tpu.matmul %9, %10, %cst_8 {dimension_numbers = #tpu.dot_dimension_numbers<[1], [0], [0], [1], [0, 0, 1, 1], [], []>} : vector<8x128xbf16>, vector<128x128xbf16>, vector<8x128xf32> -> vector<8x128xf32>
    %c0_9 = arith.constant 0 : index
    %c0_10 = arith.constant 0 : index
    %12 = vector.load %arg5[%c0_9, %c0_10] : memref<1x128xf32, #tpu.memory_space<vmem>>, vector<1x128xf32>
    %13 = vector.broadcast %12 : vector<1x128xf32> to vector<8x128xf32>
    %14 = arith.addf %11, %13 : vector<8x128xf32>
    %cst_11 = arith.constant 0.000000e+00 : f32
    %15 = vector.broadcast %cst_11 : f32 to vector<8x128xf32>
    %16 = arith.maximumf %14, %15 : vector<8x128xf32>
    %17 = arith.truncf %16 : vector<8x128xf32> to vector<8x128xbf16>
    %c0_12 = arith.constant 0 : index
    %c0_13 = arith.constant 0 : index
    %18 = vector.load %arg6[%c0_12, %c0_13] : memref<128x128xbf16, #tpu.memory_space<vmem>>, vector<128x128xbf16>
    %cst_14 = arith.constant dense<0.000000e+00> : vector<8x128xf32>
    %19 = tpu.matmul %17, %18, %cst_14 {dimension_numbers = #tpu.dot_dimension_numbers<[1], [0], [0], [1], [0, 0, 1, 1], [], []>} : vector<8x128xbf16>, vector<128x128xbf16>, vector<8x128xf32> -> vector<8x128xf32>
    %c0_15 = arith.constant 0 : index
    %c0_16 = arith.constant 0 : index
    %20 = vector.load %arg7[%c0_15, %c0_16] : memref<1x128xf32, #tpu.memory_space<vmem>>, vector<1x128xf32>
    %21 = vector.broadcast %20 : vector<1x128xf32> to vector<8x128xf32>
    %22 = arith.addf %19, %21 : vector<8x128xf32>
    %23 = tpu.iota {dimensions = array<i32: 1>} : vector<8x128xi32>
    %cst_17 = arith.constant -2.000000e+01 : f32
    %cst_18 = arith.constant 2.000000e+00 : f32
    %24 = vector.broadcast %cst_17 : f32 to vector<8x128xf32>
    %25 = arith.maximumf %24, %22 : vector<8x128xf32>
    %26 = vector.broadcast %cst_18 : f32 to vector<8x128xf32>
    %27 = arith.minimumf %26, %25 : vector<8x128xf32>
    %c64_i32 = arith.constant 64 : i32
    %28 = vector.broadcast %c64_i32 : i32 to vector<8x128xi32>
    %29 = arith.cmpi sge, %23, %28 : vector<8x128xi32>
    %30 = arith.select %29, %27, %22 : vector<8x128xi1>, vector<8x128xf32>
    %c0_19 = arith.constant 0 : index
    %c0_20 = arith.constant 0 : index
    %31 = vector.load %arg8[%c0_19, %c0_20] : memref<8x128xf32, #tpu.memory_space<vmem>>, vector<8x128xf32>
    tpu.vector_store %arg8[%c0_19, %c0_20], %30 {strides = array<i32>} : memref<8x128xf32, #tpu.memory_space<vmem>>, vector<8x128xf32>,
    return
  }
  func.func @transform_0(%arg0: i32) -> (i32, i32) {
    %c0_i32 = arith.constant 0 : i32
    %c0_i32_0 = arith.constant 0 : i32
    return %arg0, %c0_i32 : i32, i32
  }
  func.func @transform_1(%arg0: i32) -> (i32, i32) {
    %c0_i32 = arith.constant 0 : i32
    %c0_i32_0 = arith.constant 0 : i32
    %c0_i32_1 = arith.constant 0 : i32
    return %c0_i32, %c0_i32_0 : i32, i32
  }
  func.func @transform_2(%arg0: i32) -> (i32, i32) {
    %c0_i32 = arith.constant 0 : i32
    %c0_i32_0 = arith.constant 0 : i32
    %c0_i32_1 = arith.constant 0 : i32
    return %c0_i32, %c0_i32_0 : i32, i32
  }
  func.func @transform_3(%arg0: i32) -> (i32, i32) {
    %c0_i32 = arith.constant 0 : i32
    %c0_i32_0 = arith.constant 0 : i32
    %c0_i32_1 = arith.constant 0 : i32
    return %c0_i32, %c0_i32_0 : i32, i32
  }
  func.func @transform_4(%arg0: i32) -> (i32, i32) {
    %c0_i32 = arith.constant 0 : i32
    %c0_i32_0 = arith.constant 0 : i32
    %c0_i32_1 = arith.constant 0 : i32
    return %c0_i32, %c0_i32_0 : i32, i32
  }
  func.func @transform_5(%arg0: i32) -> (i32, i32) {
    %c0_i32 = arith.constant 0 : i32
    %c0_i32_0 = arith.constant 0 : i32
    %c0_i32_1 = arith.constant 0 : i32
    return %c0_i32, %c0_i32_0 : i32, i32
  }
  func.func @transform_6(%arg0: i32) -> (i32, i32) {
    %c0_i32 = arith.constant 0 : i32
    %c0_i32_0 = arith.constant 0 : i32
    %c0_i32_1 = arith.constant 0 : i32
    return %c0_i32, %c0_i32_0 : i32, i32
  }
  func.func @transform_7(%arg0: i32) -> (i32, i32) {
    %c0_i32 = arith.constant 0 : i32
    %c0_i32_0 = arith.constant 0 : i32
    return %arg0, %c0_i32 : i32, i32
  }
}

</mosaic_0001>

<llo_original>
// kernel: gaussian_policy_forward.1
$region0: #{gaussian_policy_forward.1}
  #allocation0 [shape = 'u32[]', space=smem, size = 0x4, offset = 0x4, fixed_abs, tag = 'smem constant byte address 0x4 - core index']
  #allocation1 [shape = 'u32[72,128]{1,0:T(1,128)}', space=vmem, size = 0x9000, scoped, tag = 'internal scratch']
  %s0 = inlined_call_operand.vmem [shape: f32[16,16], index: 0, kind: input, shape index: {}]
  %s1 = inlined_call_operand.vmem [shape: bf16[16,128], index: 1, kind: input, shape index: {}]
  %s2 = inlined_call_operand.vmem [shape: f32[1,128], index: 2, kind: input, shape index: {}]
  %s3 = inlined_call_operand.hbm [shape: bf16[128,128], index: 3, kind: input, shape index: {}]
  %s4 = inlined_call_operand.vmem [shape: f32[1,128], index: 4, kind: input, shape index: {}]
  %s5 = inlined_call_operand.hbm [shape: bf16[128,128], index: 5, kind: input, shape index: {}]
  %s6 = inlined_call_operand.vmem [shape: f32[1,128], index: 6, kind: input, shape index: {}]
  %s7 = inlined_call_operand.vmem [shape: f32[16,128], index: 7, kind: output, shape index: {}]
  %s8 = sld [smem:[#allocation0]]
  $region69: #{gaussian_policy_forward.1} parent=0
    _
  %s10 = ssub.s32 1, %s8
  %s11 = scalar_select 0, %s10, %s8
  $region1: #{gaussian_policy_forward.1} parent=0
    #allocation2 [shape = 'u8[32768]{0}', space=vmem, size = 0x8000, scoped, tag = 'input window, operand 3, single buffered']
    #allocation3 [shape = 's32[2]{0}', space=sflag, size = 0x8, scoped, tag = 'scoped memory for gaussian_policy_forward.1']
    #allocation4 [shape = 'u8[32768]{0}', space=vmem, size = 0x8000, scoped, tag = 'input window, operand 5, single buffered']
    #allocation5 [shape = 's32[1]{0}', space=sflag, size = 0x4, scoped, tag = 'scoped memory for gaussian_policy_forward.1']
    %12 = vsyncpa [#allocation3], 0
    %13 = vsyncpa [#allocation5], 0
    loop: start=0, step=1, limit=4
    $region2: #{gaussian_policy_forward.1} parent=1 // loop_pre_header
      _
    $region3: #{gaussian_policy_forward.1} parent=1 // loop_header
      %s15 = sphi 0, %s19
      %p16 = scmp.ge.s32.totalorder %s15, 4
      %s25 = sphi 0, %s27
      %s28 = sphi 0, %s25
      %s29 = sphi 0, %s28
      %s45 = sphi 0, %s29
      %s49 = sphi 0, %s49
      %s51 = sphi 0, %s49
      %s52 = sphi 0, %s51
      %s66 = sphi 0, %s52
      %s70 = sphi 0, %s70
      %s72 = sphi 0, %s70
      %s73 = sphi 0, %s72
      %s87 = sphi 0, %s73
      %s91 = sphi 0, %s91
      %s93 = sphi 0, %s91
      %s94 = sphi 0, %s93
      %s108 = sphi 0, %s94
      %s112 = sphi 0, %s112
      %s114 = sphi 0, %s112
      %s115 = sphi 0, %s114
      %s129 = sphi 0, %s115
      %s133 = sphi 0, %s133
      %s135 = sphi 0, %s133
      %s136 = sphi 0, %s135
      %s150 = sphi 0, %s136
      %s154 = sphi 0, %s154
      %s156 = sphi 0, %s154
      %s157 = sphi 0, %s156
      %s171 = sphi 0, %s157
      %s177 = sphi 0, %s179
      %s180 = sphi 0, %s177
      %s181 = sphi 0, %s180
      %s197 = sphi 0, %s181
    $region4: #{gaussian_policy_forward.1} parent=1 // loop_header_branch
      %18 = sbr.rel (%p16) target = $region8
    $region5: #{gaussian_policy_forward.1} parent=1 // loop_body
      %s20 = ssub.s32 %s15, 1
      %s21 = ssub.s32 %s15, 2
      %s22 = sadd.s32 %s15, 1
      %s23 = ssub.s32 %s15, %s22
      %p24 = scmp.eq.s32.totalorder %s23, 0
      %s26 = sadd.s32 %s25, 1
      %s27 = scalar_select %p24, %s25, %s26
      %p30 = pneg %p24
      %p31 = scmp.eq.s32.totalorder %s15, 1
      %p32 = por %p30, %p31
      %p33 = scmp.ne.s32.totalorder %s25, %s28
      %p34 = scmp.eq.s32.totalorder %s15, 0
      %p35 = por %p33, %p34
      %p36 = scmp.ne.s32.totalorder %s25, %s28
      %p37 = scmp.eq.s32.totalorder %s20, 1
      %p38 = por %p36, %p37
      %p39 = scmp.ne.s32.totalorder %s28, %s29
      %p40 = scmp.eq.s32.totalorder %s20, 0
      %p41 = por %p39, %p40
      %p42 = scmp.ne.s32.totalorder %s28, %s29
      %p43 = scmp.eq.s32.totalorder %s21, 1
      %p44 = por %p42, %p43
      %p46 = scmp.ne.s32.totalorder %s29, %s45
      %p47 = scmp.eq.s32.totalorder %s21, 0
      %p48 = por %p46, %p47
      %s50 = sadd.s32 %s49, 1
      %p53 = scmp.eq.s32.totalorder %s15, 1
      %p54 = scmp.ne.s32.totalorder %s49, %s51
      %p55 = scmp.eq.s32.totalorder %s15, 0
      %p56 = por %p54, %p55
      %p57 = scmp.ne.s32.totalorder %s49, %s51
      %p58 = scmp.eq.s32.totalorder %s20, 1
      %p59 = por %p57, %p58
      %p60 = scmp.ne.s32.totalorder %s51, %s52
      %p61 = scmp.eq.s32.totalorder %s20, 0
      %p62 = por %p60, %p61
      %p63 = scmp.ne.s32.totalorder %s51, %s52
      %p64 = scmp.eq.s32.totalorder %s21, 1
      %p65 = por %p63, %p64
      %p67 = scmp.ne.s32.totalorder %s52, %s66
      %p68 = scmp.eq.s32.totalorder %s21, 0
      %p69 = por %p67, %p68
      %s71 = sadd.s32 %s70, 1
      %p74 = scmp.eq.s32.totalorder %s15, 1
      %p75 = scmp.ne.s32.totalorder %s70, %s72
      %p76 = scmp.eq.s32.totalorder %s15, 0
      %p77 = por %p75, %p76
      %p78 = scmp.ne.s32.totalorder %s70, %s72
      %p79 = scmp.eq.s32.totalorder %s20, 1
      %p80 = por %p78, %p79
      %p81 = scmp.ne.s32.totalorder %s72, %s73
      %p82 = scmp.eq.s32.totalorder %s20, 0
      %p83 = por %p81, %p82
      %p84 = scmp.ne.s32.totalorder %s72, %s73
      %p85 = scmp.eq.s32.totalorder %s21, 1
      %p86 = por %p84, %p85
      %p88 = scmp.ne.s32.totalorder %s73, %s87
      %p89 = scmp.eq.s32.totalorder %s21, 0
      %p90 = por %p88, %p89
      %s92 = sadd.s32 %s91, 1
      %p95 = scmp.eq.s32.totalorder %s15, 1
      %p96 = scmp.ne.s32.totalorder %s91, %s93
      %p97 = scmp.eq.s32.totalorder %s15, 0
      %p98 = por %p96, %p97
      %p99 = scmp.ne.s32.totalorder %s91, %s93
      %p100 = scmp.eq.s32.totalorder %s20, 1
      %p101 = por %p99, %p100
      %p102 = scmp.ne.s32.totalorder %s93, %s94
      %p103 = scmp.eq.s32.totalorder %s20, 0
      %p104 = por %p102, %p103
      %p105 = scmp.ne.s32.totalorder %s93, %s94
      %p106 = scmp.eq.s32.totalorder %s21, 1
      %p107 = por %p105, %p106
      %p109 = scmp.ne.s32.totalorder %s94, %s108
      %p110 = scmp.eq.s32.totalorder %s21, 0
      %p111 = por %p109, %p110
      %s113 = sadd.s32 %s112, 1
      %p116 = scmp.eq.s32.totalorder %s15, 1
      %p117 = scmp.ne.s32.totalorder %s112, %s114
      %p118 = scmp.eq.s32.totalorder %s15, 0
      %p119 = por %p117, %p118
      %p120 = scmp.ne.s32.totalorder %s112, %s114
      %p121 = scmp.eq.s32.totalorder %s20, 1
      %p122 = por %p120, %p121
      %p123 = scmp.ne.s32.totalorder %s114, %s115
      %p124 = scmp.eq.s32.totalorder %s20, 0
      %p125 = por %p123, %p124
      %p126 = scmp.ne.s32.totalorder %s114, %s115
      %p127 = scmp.eq.s32.totalorder %s21, 1
      %p128 = por %p126, %p127
      %p130 = scmp.ne.s32.totalorder %s115, %s129
      %p131 = scmp.eq.s32.totalorder %s21, 0
      %p132 = por %p130, %p131
      %s134 = sadd.s32 %s133, 1
      %p137 = scmp.eq.s32.totalorder %s15, 1
      %p138 = scmp.ne.s32.totalorder %s133, %s135
      %p139 = scmp.eq.s32.totalorder %s15, 0
      %p140 = por %p138, %p139
      %p141 = scmp.ne.s32.totalorder %s133, %s135
      %p142 = scmp.eq.s32.totalorder %s20, 1
      %p143 = por %p141, %p142
      %p144 = scmp.ne.s32.totalorder %s135, %s136
      %p145 = scmp.eq.s32.totalorder %s20, 0
      %p146 = por %p144, %p145
      %p147 = scmp.ne.s32.totalorder %s135, %s136
      %p148 = scmp.eq.s32.totalorder %s21, 1
      %p149 = por %p147, %p148
      %p151 = scmp.ne.s32.totalorder %s136, %s150
      %p152 = scmp.eq.s32.totalorder %s21, 0
      %p153 = por %p151, %p152
      %s155 = sadd.s32 %s154, 1
      %p158 = scmp.eq.s32.totalorder %s15, 1
      %p159 = scmp.ne.s32.totalorder %s154, %s156
      %p160 = scmp.eq.s32.totalorder %s15, 0
      %p161 = por %p159, %p160
      %p162 = scmp.ne.s32.totalorder %s154, %s156
      %p163 = scmp.eq.s32.totalorder %s20, 1
      %p164 = por %p162, %p163
      %p165 = scmp.ne.s32.totalorder %s156, %s157
      %p166 = scmp.eq.s32.totalorder %s20, 0
      %p167 = por %p165, %p166
      %p168 = scmp.ne.s32.totalorder %s156, %s157
      %p169 = scmp.eq.s32.totalorder %s21, 1
      %p170 = por %p168, %p169
      %p172 = scmp.ne.s32.totalorder %s157, %s171
      %p173 = scmp.eq.s32.totalorder %s21, 0
      %p174 = por %p172, %p173
      %s175 = ssub.s32 %s15, %s22
      %p176 = scmp.eq.s32.totalorder %s175, 0
      %s178 = sadd.s32 %s177, 1
      %s179 = scalar_select %p176, %s177, %s178
      %p182 = pneg %p176
      %p183 = scmp.eq.s32.totalorder %s15, 1
      %p184 = por %p182, %p183
      %p185 = scmp.ne.s32.totalorder %s177, %s180
      %p186 = scmp.eq.s32.totalorder %s15, 0
      %p187 = por %p185, %p186
      %p188 = scmp.ne.s32.totalorder %s177, %s180
      %p189 = scmp.eq.s32.totalorder %s20, 1
      %p190 = por %p188, %p189
      %p191 = scmp.ne.s32.totalorder %s180, %s181
      %p192 = scmp.eq.s32.totalorder %s20, 0
      %p193 = por %p191, %p192
      %p194 = scmp.ne.s32.totalorder %s180, %s181
      %p195 = scmp.eq.s32.totalorder %s21, 1
      %p196 = por %p194, %p195
      %p198 = scmp.ne.s32.totalorder %s181, %s197
      %p199 = scmp.eq.s32.totalorder %s21, 0
      %p200 = por %p198, %p199
      %p201 = scmp.le.s32.totalorder 1, %s15
      %p202 = scmp.lt.s32.totalorder %s15, 3
      %p203 = pnand %p201, %p202
      %p204 = pneg %p203
      // Predicated region
      $region9: #{gaussian_policy_forward.1} parent=5 // pred_check
        _
      $region10: #{gaussian_policy_forward.1} parent=5 // pred_check_branch
        %206 = sbr.rel (%p203) target = $region12
      $region11: #{gaussian_policy_forward.1} parent=5 // pred_region
        %s207 = ssub.s32 %s15, 1
        // Predicated region
        $region13: #{gaussian_policy_forward.1} parent=11 // pred_check
          %p208 = pneg %p62
        $region14: #{gaussian_policy_forward.1} parent=11 // pred_check_branch
          %210 = sbr.rel (%p208) target = $region16
        $region15: #{gaussian_policy_forward.1} parent=11 // pred_region
          _
        $region16: #{gaussian_policy_forward.1} parent=11 // pred_fallthru
          _
        // Predicated region
        $region17: #{gaussian_policy_forward.1} parent=11 // pred_check
          %p211 = pneg %p83
        $region18: #{gaussian_policy_forward.1} parent=11 // pred_check_branch
          %213 = sbr.rel (%p211) target = $region20
        $region19: #{gaussian_policy_forward.1} parent=11 // pred_region
          _
        $region20: #{gaussian_policy_forward.1} parent=11 // pred_fallthru
          _
        // Predicated region
        $region21: #{gaussian_policy_forward.1} parent=11 // pred_check
          %p214 = pneg %p104
        $region22: #{gaussian_policy_forward.1} parent=11 // pred_check_branch
          %216 = sbr.rel (%p214) target = $region24
        $region23: #{gaussian_policy_forward.1} parent=11 // pred_region
          %218 = vsyncadd [#allocation3], 0
          %s219 = sshll.u32 %s3, 4
          %s220 = int_to_ptr.hbm [resolvable:$true] %s219
          %s221 = sshll.u32 [#allocation2], 4
          %s222 = int_to_ptr.vmem [resolvable:$true] %s221
          %227 = dma.hbm_to_vmem [thread:$0]  %s220, 1024, %s222, [#allocation3], 64, 64, 4
        $region24: #{gaussian_policy_forward.1} parent=11 // pred_fallthru
          _
        // Predicated region
        $region25: #{gaussian_policy_forward.1} parent=11 // pred_check
          %p228 = pneg %p125
        $region26: #{gaussian_policy_forward.1} parent=11 // pred_check_branch
          %230 = sbr.rel (%p228) target = $region28
        $region27: #{gaussian_policy_forward.1} parent=11 // pred_region
          _
        $region28: #{gaussian_policy_forward.1} parent=11 // pred_fallthru
          _
        // Predicated region
        $region29: #{gaussian_policy_forward.1} parent=11 // pred_check
          %p231 = pneg %p146
        $region30: #{gaussian_policy_forward.1} parent=11 // pred_check_branch
          %233 = sbr.rel (%p231) target = $region32
        $region31: #{gaussian_policy_forward.1} parent=11 // pred_region
          %235 = vsyncadd [#allocation5], 0
          %s236 = sshll.u32 %s5, 4
          %s237 = int_to_ptr.hbm [resolvable:$true] %s236
          %s238 = sshll.u32 [#allocation4], 4
          %s239 = int_to_ptr.vmem [resolvable:$true] %s238
          %244 = dma.hbm_to_vmem [thread:$0]  %s237, 1024, %s239, [#allocation5], 64, 64, 4
        $region32: #{gaussian_policy_forward.1} parent=11 // pred_fallthru
          _
        // Predicated region
        $region33: #{gaussian_policy_forward.1} parent=11 // pred_check
          %p245 = pneg %p167
        $region34: #{gaussian_policy_forward.1} parent=11 // pred_check_branch
          %247 = sbr.rel (%p245) target = $region36
        $region35: #{gaussian_policy_forward.1} parent=11 // pred_region
          _
        $region36: #{gaussian_policy_forward.1} parent=11 // pred_fallthru
          _
      $region12: #{gaussian_policy_forward.1} parent=5 // pred_fallthru
        _
      %p248 = scmp.lt.s32.totalorder %s15, 2
      // Predicated region
      $region37: #{gaussian_policy_forward.1} parent=5 // pred_check
        %p249 = pneg %p248
      $region38: #{gaussian_policy_forward.1} parent=5 // pred_check_branch
        %251 = sbr.rel (%p249) target = $region40
      $region39: #{gaussian_policy_forward.1} parent=5 // pred_region
        // Predicated region
        $region41: #{gaussian_policy_forward.1} parent=39 // pred_check
          %p252 = pneg %p35
        $region42: #{gaussian_policy_forward.1} parent=39 // pred_check_branch
          %254 = sbr.rel (%p252) target = $region44
        $region43: #{gaussian_policy_forward.1} parent=39 // pred_region
          %p255 = scmp.lt.s32.totalorder %s15, 1
          %s256 = scalar_select %p255, %s15, 1
          %s257 = smul.addr %s256, 8
          %s258 = scalar_lea.vmem %s0, %s257
        $region44: #{gaussian_policy_forward.1} parent=39 // pred_fallthru
          _
      $region40: #{gaussian_policy_forward.1} parent=5 // pred_fallthru
        _
      %p259 = scmp.le.s32.totalorder 1, %s15
      %p260 = scmp.lt.s32.totalorder %s15, 3
      %p261 = pnand %p259, %p260
      %p262 = pneg %p261
      // Predicated region
      $region45: #{gaussian_policy_forward.1} parent=5 // pred_check
        _
      $region46: #{gaussian_policy_forward.1} parent=5 // pred_check_branch
        %264 = sbr.rel (%p261) target = $region48
      $region47: #{gaussian_policy_forward.1} parent=5 // pred_region
        %s265 = ssub.s32 %s15, 1
        // Predicated region
        $region49: #{gaussian_policy_forward.1} parent=47 // pred_check
          %p266 = pneg %p104
        $region50: #{gaussian_policy_forward.1} parent=47 // pred_check_branch
          %268 = sbr.rel (%p266) target = $region52
        $region51: #{gaussian_policy_forward.1} parent=47 // pred_region
          %270 = dma.done [#allocation3], 1024
        $region52: #{gaussian_policy_forward.1} parent=47 // pred_fallthru
          _
        // Predicated region
        $region53: #{gaussian_policy_forward.1} parent=47 // pred_check
          %p271 = pneg %p146
        $region54: #{gaussian_policy_forward.1} parent=47 // pred_check_branch
          %273 = sbr.rel (%p271) target = $region56
        $region55: #{gaussian_policy_forward.1} parent=47 // pred_region
          %275 = dma.done [#allocation5], 1024
        $region56: #{gaussian_policy_forward.1} parent=47 // pred_fallthru
          _
        %p276 = scmp.lt.s32.totalorder %s20, 1
        %s277 = scalar_select %p276, %s20, 1
        %s278 = smul.addr %s277, 8
        %s279 = scalar_lea.vmem %s0, %s278
        %p280 = pneg %p41
        %p281 = pneg %p38
        %p282 = pneg %p62
        %p283 = pneg %p59
        %p284 = pneg %p83
        %p285 = pneg %p80
        %p286 = pneg %p104
        %p287 = pneg %p101
        %p288 = pneg %p125
        %p289 = pneg %p122
        %p290 = pneg %p146
        %p291 = pneg %p143
        %p292 = pneg %p167
        %p293 = pneg %p164
        %p294 = pneg %p193
        %p295 = pneg %p190
        %p296 = scmp.lt.s32.totalorder %s20, 1
        %s297 = scalar_select %p296, %s20, 1
        %s298 = smul.addr %s297, 8
        %s299 = scalar_lea.vmem %s7, %s298
        %p300 = scmp.lt.s32.totalorder %s20, 1
        %s301 = scalar_select %p300, %s20, 1
        %s302 = smul.addr %s301, 8
        %s303 = scalar_lea.vmem %s0, %s302
        %p304 = scmp.lt.s32.totalorder %s20, 1
        %s305 = scalar_select %p304, %s20, 1
        %s306 = smul.addr %s305, 8
        %s307 = scalar_lea.vmem %s7, %s306
        %v309 = vld [vmem:[%s303] sm:$0xff]
        %v310 = vpack.c.bf16 %v309, %v309
        %v311 = vld [vmem:[%s1] sm:$0xf]
        %v312 = vld [vmem:[%s1 + $0x4] sm:$0xf]
        %v313 = vld [vmem:[%s2] sm:$0x1]
        %v315 = vperm.slane %v313, 0
        %v319 = vunpack.c.l.b16 %v311
        %v320 = vunpack.c.l.b16 %v312
        %v321 = vpack.c.b16 %v320, %v319
        %vm323 = vcmask 130048
        %v325 = vsel %vm323, %v310, 0
        %327 = vmatpush.bf16.msra.mxu0 0
        %328 = vmatpush.bf16.msra.mxu0 0
        %329 = vmatpush.bf16.msra.mxu0 0
        %330 = vmatpush.bf16.msra.mxu0 0
        %331 = vmatpush.bf16.msra.mxu0 0
        %332 = vmatpush.bf16.msra.mxu0 0
        %333 = vmatpush.bf16.msra.mxu0 0
        %334 = vmatpush.bf16.msra.mxu0 %v321
        %335 = vmatmul.bf16.gmra.mxu0 %v325
        %v336 = vpop.f32.mrf.mxu0
        %v337 = vadd.f32 %v315, %v336
        %v338 = vpop.f32.mrf.mxu0
        %339 = vdwg.mxu0
        %v340 = vmax.f32 %v337, 0.0
        %v341 = vpack.c.bf16 %v340, %v340
        %v342 = vld [vmem:[#allocation2] sm:$0xf]
        %v343 = vld [vmem:[#allocation2 + $0x4] sm:$0xf]
        %v344 = vld [vmem:[#allocation2 + $0x8] sm:$0xf]
        %v345 = vld [vmem:[#allocation2 + $0xc] sm:$0xf]
        %v346 = vld [vmem:[#allocation2 + $0x10] sm:$0xf]
        %v347 = vld [vmem:[#allocation2 + $0x14] sm:$0xf]
        %v348 = vld [vmem:[#allocation2 + $0x18] sm:$0xf]
        %v349 = vld [vmem:[#allocation2 + $0x1c] sm:$0xf]
        %v350 = vld [vmem:[#allocation2 + $0x20] sm:$0xf]
        %v351 = vld [vmem:[#allocation2 + $0x24] sm:$0xf]
        %v352 = vld [vmem:[#allocation2 + $0x28] sm:$0xf]
        %v353 = vld [vmem:[#allocation2 + $0x2c] sm:$0xf]
        %v354 = vld [vmem:[#allocation2 + $0x30] sm:$0xf]
        %v355 = vld [vmem:[#allocation2 + $0x34] sm:$0xf]
        %v356 = vld [vmem:[#allocation2 + $0x38] sm:$0xf]
        %v357 = vld [vmem:[#allocation2 + $0x3c] sm:$0xf]
        %v358 = vld [vmem:[%s4] sm:$0x1]
        %v360 = vperm.slane %v358, 0
        %v378 = vunpack.c.l.b16 %v342
        %v379 = vunpack.c.l.b16 %v343
        %v380 = vunpack.c.l.b16 %v344
        %v381 = vunpack.c.l.b16 %v345
        %v382 = vunpack.c.l.b16 %v346
        %v383 = vunpack.c.l.b16 %v347
        %v384 = vunpack.c.l.b16 %v348
        %v385 = vunpack.c.l.b16 %v349
        %v386 = vunpack.c.l.b16 %v350
        %v387 = vunpack.c.l.b16 %v351
        %v388 = vunpack.c.l.b16 %v352
        %v389 = vunpack.c.l.b16 %v353
        %v390 = vunpack.c.l.b16 %v354
        %v391 = vunpack.c.l.b16 %v355
        %v392 = vunpack.c.l.b16 %v356
        %v393 = vunpack.c.l.b16 %v357
        %v394 = vpack.c.b16 %v379, %v378
        %v395 = vpack.c.b16 %v381, %v380
        %v396 = vpack.c.b16 %v383, %v382
        %v397 = vpack.c.b16 %v385, %v384
        %v398 = vpack.c.b16 %v387, %v386
        %v399 = vpack.c.b16 %v389, %v388
        %v400 = vpack.c.b16 %v391, %v390
        %v401 = vpack.c.b16 %v393, %v392
        %410 = vmatpush.bf16.msra.mxu0 %v401
        %411 = vmatpush.bf16.msra.mxu0 %v400
        %412 = vmatpush.bf16.msra.mxu0 %v399
        %413 = vmatpush.bf16.msra.mxu0 %v398
        %414 = vmatpush.bf16.msra.mxu0 %v397
        %415 = vmatpush.bf16.msra.mxu0 %v396
        %416 = vmatpush.bf16.msra.mxu0 %v395
        %417 = vmatpush.bf16.msra.mxu0 %v394
        %418 = vmatmul.bf16.gmra.mxu0 %v341
        %v419 = vpop.f32.mrf.mxu0
        %v420 = vadd.f32 %v360, %v419
        %v421 = vpop.f32.mrf.mxu0
        %422 = vdwg.mxu0
        %v423 = vmax.f32 %v420, 0.0
        %v424 = vpack.c.bf16 %v423, %v423
        %v425 = vld [vmem:[#allocation4] sm:$0xf]
        %v426 = vld [vmem:[#allocation4 + $0x4] sm:$0xf]
        %v427 = vld [vmem:[#allocation4 + $0x8] sm:$0xf]
        %v428 = vld [vmem:[#allocation4 + $0xc] sm:$0xf]
        %v429 = vld [vmem:[#allocation4 + $0x10] sm:$0xf]
        %v430 = vld [vmem:[#allocation4 + $0x14] sm:$0xf]
        %v431 = vld [vmem:[#allocation4 + $0x18] sm:$0xf]
        %v432 = vld [vmem:[#allocation4 + $0x1c] sm:$0xf]
        %v433 = vld [vmem:[#allocation4 + $0x20] sm:$0xf]
        %v434 = vld [vmem:[#allocation4 + $0x24] sm:$0xf]
        %v435 = vld [vmem:[#allocation4 + $0x28] sm:$0xf]
        %v436 = vld [vmem:[#allocation4 + $0x2c] sm:$0xf]
        %v437 = vld [vmem:[#allocation4 + $0x30] sm:$0xf]
        %v438 = vld [vmem:[#allocation4 + $0x34] sm:$0xf]
        %v439 = vld [vmem:[#allocation4 + $0x38] sm:$0xf]
        %v440 = vld [vmem:[#allocation4 + $0x3c] sm:$0xf]
        %v441 = vld [vmem:[%s6] sm:$0x1]
        %v443 = vperm.slane %v441, 0
        %v461 = vunpack.c.l.b16 %v425
        %v462 = vunpack.c.l.b16 %v426
        %v463 = vunpack.c.l.b16 %v427
        %v464 = vunpack.c.l.b16 %v428
        %v465 = vunpack.c.l.b16 %v429
        %v466 = vunpack.c.l.b16 %v430
        %v467 = vunpack.c.l.b16 %v431
        %v468 = vunpack.c.l.b16 %v432
        %v469 = vunpack.c.l.b16 %v433
        %v470 = vunpack.c.l.b16 %v434
        %v471 = vunpack.c.l.b16 %v435
        %v472 = vunpack.c.l.b16 %v436
        %v473 = vunpack.c.l.b16 %v437
        %v474 = vunpack.c.l.b16 %v438
        %v475 = vunpack.c.l.b16 %v439
        %v476 = vunpack.c.l.b16 %v440
        %v477 = vpack.c.b16 %v462, %v461
        %v478 = vpack.c.b16 %v464, %v463
        %v479 = vpack.c.b16 %v466, %v465
        %v480 = vpack.c.b16 %v468, %v467
        %v481 = vpack.c.b16 %v470, %v469
        %v482 = vpack.c.b16 %v472, %v471
        %v483 = vpack.c.b16 %v474, %v473
        %v484 = vpack.c.b16 %v476, %v475
        %493 = vmatpush.bf16.msra.mxu0 %v484
        %494 = vmatpush.bf16.msra.mxu0 %v483
        %495 = vmatpush.bf16.msra.mxu0 %v482
        %496 = vmatpush.bf16.msra.mxu0 %v481
        %497 = vmatpush.bf16.msra.mxu0 %v480
        %498 = vmatpush.bf16.msra.mxu0 %v479
        %499 = vmatpush.bf16.msra.mxu0 %v478
        %500 = vmatpush.bf16.msra.mxu0 %v477
        %501 = vmatmul.bf16.gmra.mxu0 %v424
        %v502 = vpop.f32.mrf.mxu0
        %v503 = vadd.f32 %v443, %v502
        %v504 = vpop.f32.mrf.mxu0
        %505 = vdwg.mxu0
        %v506 = vlaneseq
        %v507 = vand.u32 %v506, 127
        %v508 = vmax.f32 %v503, -20.0
        %v509 = vmin.f32 %v508, 2.0
        %vm510 = vcmp.ge.s32.totalorder %v507, 64
        %v511 = vsel %vm510, %v509, %v503
        %512 = vst [vmem:[%s307] sm:$0xff] %v511
        %p513 = scmp.lt.s32.totalorder %s20, 1
        %s514 = scalar_select %p513, %s20, 1
        %s515 = smul.addr %s514, 8
        %s516 = scalar_lea.vmem %s7, %s515
        // Predicated region
        $region57: #{gaussian_policy_forward.1} parent=47 // pred_check
          %p517 = pneg %p190
        $region58: #{gaussian_policy_forward.1} parent=47 // pred_check_branch
          %519 = sbr.rel (%p517) target = $region60
        $region59: #{gaussian_policy_forward.1} parent=47 // pred_region
          _
        $region60: #{gaussian_policy_forward.1} parent=47 // pred_fallthru
          _
      $region48: #{gaussian_policy_forward.1} parent=5 // pred_fallthru
        _
      %p520 = scmp.le.s32.totalorder 2, %s15
      // Predicated region
      $region61: #{gaussian_policy_forward.1} parent=5 // pred_check
        %p521 = pneg %p520
      $region62: #{gaussian_policy_forward.1} parent=5 // pred_check_branch
        %523 = sbr.rel (%p521) target = $region64
      $region63: #{gaussian_policy_forward.1} parent=5 // pred_region
        %s524 = ssub.s32 %s15, 2
        // Predicated region
        $region65: #{gaussian_policy_forward.1} parent=63 // pred_check
          %p525 = pneg %p196
        $region66: #{gaussian_policy_forward.1} parent=63 // pred_check_branch
          %527 = sbr.rel (%p525) target = $region68
        $region67: #{gaussian_policy_forward.1} parent=63 // pred_region
          %p528 = scmp.lt.s32.totalorder %s21, 1
          %s529 = scalar_select %p528, %s21, 1
          %s530 = smul.addr %s529, 8
          %s531 = scalar_lea.vmem %s7, %s530
        $region68: #{gaussian_policy_forward.1} parent=63 // pred_fallthru
          _
      $region64: #{gaussian_policy_forward.1} parent=5 // pred_fallthru
        _
    $region6: #{gaussian_policy_forward.1} parent=1 // loop_footer
      %s19 = sadd.s32 1, %s15
    $region7: #{gaussian_policy_forward.1} parent=1 // loop_footer_branch
      %14 = sbr.rel target = $region3
    $region8: #{gaussian_policy_forward.1} parent=1 // loop_exit
      _
    %532 = vsyncpa [#allocation3], 1
    %s533 = scalar_lea.sflag [#allocation3], 1
    %534 = vsyncpa %s533, 1
    %535 = vsyncpa [#allocation5], 1

</llo_original>
